<compile_context>
chip_gen: v6e
topology: v6e:2x2x1
jax: 0.10.0
libtpu: 0.0.40
codegen_flags: <defaults>
</compile_context>

<pallas_src>
import jax
import jax.numpy as jnp
from jax.experimental import pallas as pl
from jax.experimental.pallas import tpu as pltpu

STATE_SIZE = 8      # LunarLander-v3 observation dim
ACTION_SIZE = 4     # LunarLander-v3 action dim
HIDDEN = 128
W3_PAD = 128        # fc3 weight padded to 128 cols (MXU/lane friendly); sliced in-kernel

W_SMALL_ROWS = 16           # rows 0-7: w1, row 8: b1, row 9: b2, row 10: b3 (padded)
W_BIG_ROWS = 2 * HIDDEN     # rows 0-127: w2, rows 128-255: w3 (cols >= 4 are zero)

MAX_TB = 2048


def _round_up(x, m):
    return ((x + m - 1) // m) * m


def dqn_kernel(x_ref, wsmall_ref, wbig_ref, o_ref):
    x = x_ref[...]                                          # (tb, 8)   f32
    w1 = wsmall_ref[0:STATE_SIZE, :]                        # (8, 128)  f32
    b1 = wsmall_ref[STATE_SIZE:STATE_SIZE + 1, :]           # (1, 128)  f32
    b2 = wsmall_ref[STATE_SIZE + 1:STATE_SIZE + 2, :]       # (1, 128)  f32
    b3 = wsmall_ref[STATE_SIZE + 2:STATE_SIZE + 3, :]       # (1, 128)  f32
    w2 = wbig_ref[0:HIDDEN, :]                              # (128,128) bf16
    w3 = wbig_ref[HIDDEN:2 * HIDDEN, :]                     # (128,128) bf16 (cols>=4 zero)

    # fc1 + relu (tiny K=8 matmul; kept f32 -- cheap, exact, v5e friendly).
    h1 = jnp.dot(x, w1, preferred_element_type=jnp.float32)
    h1 = jnp.maximum(h1 + b1, 0.0)
    # fc2 + relu (bf16 MXU inputs, f32 accumulation, f32 elementwise).
    h2 = jnp.dot(h1.astype(jnp.bfloat16), w2, preferred_element_type=jnp.float32)
    h2 = jnp.maximum(h2 + b2, 0.0)
    # fc3 (no activation), 128-wide matmul; only ACTION_SIZE columns leave VMEM.
    out = jnp.dot(h2.astype(jnp.bfloat16), w3, preferred_element_type=jnp.float32)
    o_ref[...] = (out + b3)[:, :ACTION_SIZE].astype(o_ref.dtype)


def _default_tb(batch):
    if batch >= 64:
        # Aim for >= 2 grid steps so dimension_semantics=("parallel",) can
        # shard the batch across both TensorCores on v7x.
        tb = pl.cdiv(batch, 2)
    else:
        tb = batch
    return max(8, min(_round_up(tb, 8), MAX_TB))


def dqn_forward(x, w_small, w_big, tb=None):
    batch = x.shape[0]
    if tb is None:
        tb = _default_tb(batch)
    tb = max(8, min(_round_up(int(tb), 8), MAX_TB))
    grid = (pl.cdiv(batch, tb),)

    flops = 2 * batch * (STATE_SIZE * HIDDEN + HIDDEN * HIDDEN + HIDDEN * W3_PAD)
    bytes_accessed = (
        batch * STATE_SIZE * 4          # x read
        + int(w_small.size) * 4         # f32 small params read
        + int(w_big.size) * 2           # bf16 weights read
        + batch * ACTION_SIZE * 4       # output write (unpadded)
    )

    out = pl.pallas_call(
        dqn_kernel,
        out_shape=jax.ShapeDtypeStruct((batch, ACTION_SIZE), jnp.float32),
        grid_spec=pltpu.PrefetchScalarGridSpec(
            num_scalar_prefetch=0,
            grid=grid,
            in_specs=[
                pl.BlockSpec((tb, STATE_SIZE), lambda i: (i, 0)),         # x tiles
                pl.BlockSpec((W_SMALL_ROWS, HIDDEN), lambda i: (0, 0)),   # resident
                pl.BlockSpec((W_BIG_ROWS, W3_PAD), lambda i: (0, 0)),     # resident
            ],
            out_specs=pl.BlockSpec((tb, ACTION_SIZE), lambda i: (i, 0)),  # narrow store
        ),
        compiler_params=pltpu.CompilerParams(
            dimension_semantics=("parallel",),  # shards batch grid across TCs on v7x
        ),
        cost_estimate=pl.CostEstimate(
            flops=flops, transcendentals=0, bytes_accessed=bytes_accessed),
    )(x, w_small, w_big)
    return out


def init_params(key):
    # Deterministic init mimicking PyTorch Linear default (uniform +- 1/sqrt(fan_in)).
    def linear_init(k, fan_in, fan_out):
        kw, kb = jax.random.split(k)
        bound = 1.0 / jnp.sqrt(fan_in)
        w = jax.random.uniform(kw, (fan_in, fan_out), jnp.float32, -bound, bound)
        b = jax.random.uniform(kb, (1, fan_out), jnp.float32, -bound, bound)
        return w, b

    k1, k2, k3 = jax.random.split(key, 3)
    w1, b1 = linear_init(k1, STATE_SIZE, HIDDEN)
    w2, b2 = linear_init(k2, HIDDEN, HIDDEN)
    w3, b3 = linear_init(k3, HIDDEN, ACTION_SIZE)
    return (w1, b1, w2, b2, w3, b3)


def pack_params(params):
    """Pack the 6 parameter tensors into 2 kernel inputs (done once, offline)."""
    w1, b1, w2, b2, w3, b3 = params
    w3_pad = jnp.zeros((HIDDEN, W3_PAD), jnp.float32).at[:, :ACTION_SIZE].set(w3)
    b3_pad = jnp.zeros((1, W3_PAD), jnp.float32).at[:, :ACTION_SIZE].set(b3)

    w_small = jnp.zeros((W_SMALL_ROWS, HIDDEN), jnp.float32)
    w_small = w_small.at[0:STATE_SIZE, :].set(w1)
    w_small = w_small.at[STATE_SIZE, :].set(b1[0])
    w_small = w_small.at[STATE_SIZE + 1, :].set(b2[0])
    w_small = w_small.at[STATE_SIZE + 2, :].set(b3_pad[0])

    w_big = jnp.concatenate([w2, w3_pad], axis=0).astype(jnp.bfloat16)
    return w_small, w_big


def reference_forward(x, w_small, w_big):
    # Pure-JAX reference mirroring the kernel numerics (bf16 matmul inputs for
    # fc2/fc3, f32 accumulation, f32 bias/relu).
    w1 = w_small[0:STATE_SIZE, :]
    b1 = w_small[STATE_SIZE:STATE_SIZE + 1, :]
    b2 = w_small[STATE_SIZE + 1:STATE_SIZE + 2, :]
    b3 = w_small[STATE_SIZE + 2:STATE_SIZE + 3, :]
    w2 = w_big[0:HIDDEN, :]
    w3 = w_big[HIDDEN:2 * HIDDEN, :]

    h1 = jnp.maximum(jnp.dot(x, w1, preferred_element_type=jnp.float32) + b1, 0.0)
    h2 = jnp.dot(h1.astype(jnp.bfloat16), w2, preferred_element_type=jnp.float32)
    h2 = jnp.maximum(h2 + b2, 0.0)
    out = jnp.dot(h2.astype(jnp.bfloat16), w3, preferred_element_type=jnp.float32)
    return (out + b3)[:, :ACTION_SIZE]


if __name__ == "__main__":
    key = jax.random.PRNGKey(0)
    pkey, xkey1, xkey2, xkey3 = jax.random.split(key, 4)
    params = init_params(pkey)
    w_small, w_big = pack_params(params)

    # Case 1: small inference batch (single grid step, no padding anywhere).
    x1 = jax.random.normal(xkey1, (8, STATE_SIZE), jnp.float32)
    out1 = jax.block_until_ready(dqn_forward(x1, w_small, w_big))
    ref1 = reference_forward(x1, w_small, w_big)
    assert out1.shape == (8, ACTION_SIZE)
    assert jnp.allclose(out1, ref1, atol=1e-2, rtol=1e-2)

    # Case 2: ragged batch exercising edge-block masking (grid=3, last tile partial).
    x2 = jax.random.normal(xkey2, (37, STATE_SIZE), jnp.float32)
    out2 = jax.block_until_ready(dqn_forward(x2, w_small, w_big, tb=16))
    ref2 = reference_forward(x2, w_small, w_big)
    assert out2.shape == (37, ACTION_SIZE)
    assert jnp.allclose(out2, ref2, atol=1e-2, rtol=1e-2)

    # Case 3: replay-minibatch-sized batch with default tb -> grid of 2 steps
    # (both TensorCores busy on v7x).
    x3 = jax.random.normal(xkey3, (100, STATE_SIZE), jnp.float32)
    out3 = jax.block_until_ready(dqn_forward(x3, w_small, w_big))
    ref3 = reference_forward(x3, w_small, w_big)
    assert out3.shape == (100, ACTION_SIZE)
    assert jnp.allclose(out3, ref3, atol=1e-2, rtol=1e-2)

    print("KERNEL_OK")
</pallas_src>

<mosaic_0001>
module attributes {stable_mosaic.version = 11 : i64} {
  func.func @dqn_kernel(%arg0: i32, %arg1: memref<8x8xf32, #tpu.memory_space<vmem>>, %arg2: memref<16x128xf32, #tpu.memory_space<vmem>>, %arg3: memref<256x128xbf16, #tpu.memory_space<vmem>>, %arg4: memref<8x4xf32, #tpu.memory_space<vmem>>) attributes {dimension_semantics = [#tpu.dimension_semantics<parallel>], iteration_bounds = array<i64: 1>, scalar_prefetch = 0 : i64, scratch_operands = 0 : i64, tpu.core_type = #tpu.core_type<tc>, window_params = [{transform_indices = @transform_0, window_bounds = array<i64: 8, 8>}, {pipeline_mode = #tpu.pipeline_mode<synchronous>, transform_indices = @transform_1, window_bounds = array<i64: 16, 128>}, {pipeline_mode = #tpu.pipeline_mode<synchronous>, transform_indices = @transform_2, window_bounds = array<i64: 256, 128>}, {transform_indices = @transform_3, window_bounds = array<i64: 8, 4>}]} {
    %c0 = arith.constant 0 : index
    %c0_0 = arith.constant 0 : index
    %0 = vector.load %arg1[%c0, %c0_0] : memref<8x8xf32, #tpu.memory_space<vmem>>, vector<8x8xf32>
    %c0_1 = arith.constant 0 : index
    %c0_2 = arith.constant 0 : index
    %1 = vector.load %arg2[%c0_1, %c0_2] : memref<16x128xf32, #tpu.memory_space<vmem>>, vector<8x128xf32>
    %c8 = arith.constant 8 : index
    %c0_3 = arith.constant 0 : index
    %2 = vector.load %arg2[%c8, %c0_3] : memref<16x128xf32, #tpu.memory_space<vmem>>, vector<1x128xf32>
    %c9 = arith.constant 9 : index
    %c0_4 = arith.constant 0 : index
    %3 = vector.load %arg2[%c9, %c0_4] : memref<16x128xf32, #tpu.memory_space<vmem>>, vector<1x128xf32>
    %c10 = arith.constant 10 : index
    %c0_5 = arith.constant 0 : index
    %4 = vector.load %arg2[%c10, %c0_5] : memref<16x128xf32, #tpu.memory_space<vmem>>, vector<1x128xf32>
    %c0_6 = arith.constant 0 : index
    %c0_7 = arith.constant 0 : index
    %5 = vector.load %arg3[%c0_6, %c0_7] : memref<256x128xbf16, #tpu.memory_space<vmem>>, vector<128x128xbf16>
    %c128 = arith.constant 128 : index
    %c0_8 = arith.constant 0 : index
    %6 = vector.load %arg3[%c128, %c0_8] : memref<256x128xbf16, #tpu.memory_space<vmem>>, vector<128x128xbf16>
    %cst = arith.constant dense<0.000000e+00> : vector<8x128xf32>
    %7 = tpu.matmul %0, %1, %cst {dimension_numbers = #tpu.dot_dimension_numbers<[1], [0], [0], [1], [0, 0, 1, 1], [], []>} : vector<8x8xf32>, vector<8x128xf32>, vector<8x128xf32> -> vector<8x128xf32>
    %8 = vector.broadcast %2 : vector<1x128xf32> to vector<8x128xf32>
    %9 = arith.addf %7, %8 : vector<8x128xf32>
    %cst_9 = arith.constant 0.000000e+00 : f32
    %10 = vector.broadcast %cst_9 : f32 to vector<8x128xf32>
    %11 = arith.maximumf %9, %10 : vector<8x128xf32>
    %12 = arith.truncf %11 : vector<8x128xf32> to vector<8x128xbf16>
    %cst_10 = arith.constant dense<0.000000e+00> : vector<8x128xf32>
    %13 = tpu.matmul %12, %5, %cst_10 {dimension_numbers = #tpu.dot_dimension_numbers<[1], [0], [0], [1], [0, 0, 1, 1], [], []>} : vector<8x128xbf16>, vector<128x128xbf16>, vector<8x128xf32> -> vector<8x128xf32>
    %14 = vector.broadcast %3 : vector<1x128xf32> to vector<8x128xf32>
    %15 = arith.addf %13, %14 : vector<8x128xf32>
    %cst_11 = arith.constant 0.000000e+00 : f32
    %16 = vector.broadcast %cst_11 : f32 to vector<8x128xf32>
    %17 = arith.maximumf %15, %16 : vector<8x128xf32>
    %18 = arith.truncf %17 : vector<8x128xf32> to vector<8x128xbf16>
    %cst_12 = arith.constant dense<0.000000e+00> : vector<8x128xf32>
    %19 = tpu.matmul %18, %6, %cst_12 {dimension_numbers = #tpu.dot_dimension_numbers<[1], [0], [0], [1], [0, 0, 1, 1], [], []>} : vector<8x128xbf16>, vector<128x128xbf16>, vector<8x128xf32> -> vector<8x128xf32>
    %20 = vector.broadcast %4 : vector<1x128xf32> to vector<8x128xf32>
    %21 = arith.addf %19, %20 : vector<8x128xf32>
    %22 = vector.extract_strided_slice %21 {offsets = [0, 0], sizes = [8, 4], strides = [1, 1]} : vector<8x128xf32> to vector<8x4xf32>
    %c0_13 = arith.constant 0 : index
    %c0_14 = arith.constant 0 : index
    %23 = vector.load %arg4[%c0_13, %c0_14] : memref<8x4xf32, #tpu.memory_space<vmem>>, vector<8x4xf32>
    tpu.vector_store %arg4[%c0_13, %c0_14], %22 {strides = array<i32>} : memref<8x4xf32, #tpu.memory_space<vmem>>, vector<8x4xf32>,
    return
  }
  func.func @transform_0(%arg0: i32) -> (i32, i32) {
    %c0_i32 = arith.constant 0 : i32
    %c0_i32_0 = arith.constant 0 : i32
    return %arg0, %c0_i32 : i32, i32
  }
  func.func @transform_1(%arg0: i32) -> (i32, i32) {
    %c0_i32 = arith.constant 0 : i32
    %c0_i32_0 = arith.constant 0 : i32
    %c0_i32_1 = arith.constant 0 : i32
    return %c0_i32, %c0_i32_0 : i32, i32
  }
  func.func @transform_2(%arg0: i32) -> (i32, i32) {
    %c0_i32 = arith.constant 0 : i32
    %c0_i32_0 = arith.constant 0 : i32
    %c0_i32_1 = arith.constant 0 : i32
    return %c0_i32, %c0_i32_0 : i32, i32
  }
  func.func @transform_3(%arg0: i32) -> (i32, i32) {
    %c0_i32 = arith.constant 0 : i32
    %c0_i32_0 = arith.constant 0 : i32
    return %arg0, %c0_i32 : i32, i32
  }
}

</mosaic_0001>

<llo_original>
// kernel: tpu_custom_call.1
$region0: #{tpu_custom_call.1}
  #allocation0 [shape = 'u32[]', space=smem, size = 0x4, offset = 0x4, fixed_abs, tag = 'smem constant byte address 0x4 - core index']
  #allocation1 [shape = 'u32[144,128]{1,0:T(1,128)}', space=vmem, size = 0x12000, scoped, tag = 'internal scratch']
  %s0 = inlined_call_operand.hbm [shape: f32[8,8], index: 0, kind: input, shape index: {}]
  %s1 = inlined_call_operand.hbm [shape: f32[16,128], index: 1, kind: input, shape index: {}]
  %s2 = inlined_call_operand.hbm [shape: bf16[256,128], index: 2, kind: input, shape index: {}]
  %s3 = inlined_call_operand.vmem [shape: f32[8,4], index: 3, kind: output, shape index: {}]
  %s4 = sld [smem:[#allocation0]]
  $region34: #{tpu_custom_call.1} parent=0
    _
  %s6 = ssub.s32 1, %s4
  %s7 = scalar_select 0, %s6, %s4
  $region1: #{tpu_custom_call.1} parent=0
    #allocation2 [shape = 'u8[4096]{0}', space=vmem, size = 0x1000, scoped, tag = 'input window, operand 0, single buffered']
    #allocation3 [shape = 's32[1]{0}', space=sflag, size = 0x4, scoped, tag = 'scoped memory for tpu_custom_call.1']
    #allocation4 [shape = 'u8[8192]{0}', space=vmem, size = 0x2000, scoped, tag = 'input window, operand 1, single buffered']
    #allocation5 [shape = 's32[1]{0}', space=sflag, size = 0x4, scoped, tag = 'scoped memory for tpu_custom_call.1']
    #allocation6 [shape = 'u8[65536]{0}', space=vmem, size = 0x10000, scoped, tag = 'input window, operand 2, single buffered']
    %8 = vsyncpa [#allocation3], 0
    %9 = vsyncpa [#allocation5], 0
    // Predicated region
    $region2: #{tpu_custom_call.1} parent=1 // pred_check
      _
    $region3: #{tpu_custom_call.1} parent=1 // pred_check_branch
      %11 = sbr.rel (0) target = $region5
    $region4: #{tpu_custom_call.1} parent=1 // pred_region
      %s13 = ssub.s32 128, 128
      %14 = vsyncadd [#allocation3], %s13
      %s16 = sshll.u32 [#allocation2], 4
      %s17 = int_to_ptr.vmem [resolvable:$true] %s16
      %19 = dma.hbm_to_vmem [thread:$0]  %s0, 128, %s17, [#allocation3]
    $region5: #{tpu_custom_call.1} parent=1 // pred_fallthru
      _
    // Predicated region
    $region6: #{tpu_custom_call.1} parent=1 // pred_check
      _
    $region7: #{tpu_custom_call.1} parent=1 // pred_check_branch
      %21 = sbr.rel (0) target = $region9
    $region8: #{tpu_custom_call.1} parent=1 // pred_region
      %s23 = ssub.s32 256, 256
      %24 = vsyncadd [#allocation5], %s23
      %s25 = sshll.u32 [#allocation4], 4
      %s26 = int_to_ptr.vmem [resolvable:$true] %s25
      %31 = dma.hbm_to_vmem [thread:$0]  %s1, 256, %s26, [#allocation5], 128, 128, 8
    $region9: #{tpu_custom_call.1} parent=1 // pred_fallthru
      _
    // Predicated region
    $region10: #{tpu_custom_call.1} parent=1 // pred_check
      _
    $region11: #{tpu_custom_call.1} parent=1 // pred_check_branch
      %33 = sbr.rel (0) target = $region13
    $region12: #{tpu_custom_call.1} parent=1 // pred_region
      %s35 = ssub.s32 2048, 2048
      %36 = vsyncadd [#allocation5], %s35
      %s37 = sshll.u32 [#allocation6], 4
      %s38 = int_to_ptr.vmem [resolvable:$true] %s37
      %43 = dma.hbm_to_vmem [thread:$0]  %s2, 2048, %s38, [#allocation5], 64, 64, 4
    $region13: #{tpu_custom_call.1} parent=1 // pred_fallthru
      _
    // Predicated region
    $region14: #{tpu_custom_call.1} parent=1 // pred_check
      _
    $region15: #{tpu_custom_call.1} parent=1 // pred_check_branch
      %45 = sbr.rel (0) target = $region17
    $region16: #{tpu_custom_call.1} parent=1 // pred_region
      %46 = dma.done [#allocation3], 128
    $region17: #{tpu_custom_call.1} parent=1 // pred_fallthru
      _
    // Predicated region
    $region18: #{tpu_custom_call.1} parent=1 // pred_check
      _
    $region19: #{tpu_custom_call.1} parent=1 // pred_check_branch
      %48 = sbr.rel (0) target = $region21
    $region20: #{tpu_custom_call.1} parent=1 // pred_region
      %49 = dma.done [#allocation5], 256
    $region21: #{tpu_custom_call.1} parent=1 // pred_fallthru
      _
    // Predicated region
    $region22: #{tpu_custom_call.1} parent=1 // pred_check
      _
    $region23: #{tpu_custom_call.1} parent=1 // pred_check_branch
      %51 = sbr.rel (0) target = $region25
    $region24: #{tpu_custom_call.1} parent=1 // pred_region
      %52 = dma.done [#allocation5], 2048
    $region25: #{tpu_custom_call.1} parent=1 // pred_fallthru
      _
    %v54 = vld [vmem:[#allocation2] sm:$0xff]
    %v55 = vld [vmem:[#allocation4] sm:$0xff]
    %v56 = vld [vmem:[#allocation4 + $0x8] sm:$0x1]
    %v57 = vld [vmem:[#allocation4 + $0x9] sm:$0x1]
    %v58 = vld [vmem:[#allocation4 + $0xa] sm:$0x1]
    %v59 = vld [vmem:[#allocation6] sm:$0xf]
    %v60 = vld [vmem:[#allocation6 + $0x4] sm:$0xf]
    %v61 = vld [vmem:[#allocation6 + $0x8] sm:$0xf]
    %v62 = vld [vmem:[#allocation6 + $0xc] sm:$0xf]
    %v63 = vld [vmem:[#allocation6 + $0x10] sm:$0xf]
    %v64 = vld [vmem:[#allocation6 + $0x14] sm:$0xf]
    %v65 = vld [vmem:[#allocation6 + $0x18] sm:$0xf]
    %v66 = vld [vmem:[#allocation6 + $0x1c] sm:$0xf]
    %v67 = vld [vmem:[#allocation6 + $0x20] sm:$0xf]
    %v68 = vld [vmem:[#allocation6 + $0x24] sm:$0xf]
    %v69 = vld [vmem:[#allocation6 + $0x28] sm:$0xf]
    %v70 = vld [vmem:[#allocation6 + $0x2c] sm:$0xf]
    %v71 = vld [vmem:[#allocation6 + $0x30] sm:$0xf]
    %v72 = vld [vmem:[#allocation6 + $0x34] sm:$0xf]
    %v73 = vld [vmem:[#allocation6 + $0x38] sm:$0xf]
    %v74 = vld [vmem:[#allocation6 + $0x3c] sm:$0xf]
    %v75 = vld [vmem:[#allocation6 + $0x40] sm:$0xf]
    %v76 = vld [vmem:[#allocation6 + $0x44] sm:$0xf]
    %v77 = vld [vmem:[#allocation6 + $0x48] sm:$0xf]
    %v78 = vld [vmem:[#allocation6 + $0x4c] sm:$0xf]
    %v79 = vld [vmem:[#allocation6 + $0x50] sm:$0xf]
    %v80 = vld [vmem:[#allocation6 + $0x54] sm:$0xf]
    %v81 = vld [vmem:[#allocation6 + $0x58] sm:$0xf]
    %v82 = vld [vmem:[#allocation6 + $0x5c] sm:$0xf]
    %v83 = vld [vmem:[#allocation6 + $0x60] sm:$0xf]
    %v84 = vld [vmem:[#allocation6 + $0x64] sm:$0xf]
    %v85 = vld [vmem:[#allocation6 + $0x68] sm:$0xf]
    %v86 = vld [vmem:[#allocation6 + $0x6c] sm:$0xf]
    %v87 = vld [vmem:[#allocation6 + $0x70] sm:$0xf]
    %v88 = vld [vmem:[#allocation6 + $0x74] sm:$0xf]
    %v89 = vld [vmem:[#allocation6 + $0x78] sm:$0xf]
    %v90 = vld [vmem:[#allocation6 + $0x7c] sm:$0xf]
    %v91 = vlaneseq
    %v92 = vshrl.u32 %v91, 7
    %v93 = vsub.s32 0, %v92
    %v94 = vrot.slane %v56, %v93
    %vm95 = vcmask 64512
    %v97 = vsel %vm95, %v54, 0
    %99 = vmatprep.subr.mxu0 0.0
    %100 = vmatpush1.msra.mxu0 0.0
    %101 = vmatprep.subr.mxu0 0.0
    %102 = vmatpush1.msra.mxu0 0.0
    %103 = vmatprep.subr.mxu0 0.0
    %104 = vmatpush1.msra.mxu0 0.0
    %105 = vmatprep.subr.mxu0 0.0
    %106 = vmatpush1.msra.mxu0 0.0
    %107 = vmatprep.subr.mxu0 0.0
    %108 = vmatpush1.msra.mxu0 0.0
    %109 = vmatprep.subr.mxu0 0.0
    %110 = vmatpush1.msra.mxu0 0.0
    %111 = vmatprep.subr.mxu0 0.0
    %112 = vmatpush1.msra.mxu0 0.0
    %113 = vmatprep.subr.mxu0 0.0
    %114 = vmatpush1.msra.mxu0 0.0
    %115 = vmatprep.subr.mxu0 0.0
    %116 = vmatpush1.msra.mxu0 0.0
    %117 = vmatprep.subr.mxu0 0.0
    %118 = vmatpush1.msra.mxu0 0.0
    %119 = vmatprep.subr.mxu0 0.0
    %120 = vmatpush1.msra.mxu0 0.0
    %121 = vmatprep.subr.mxu0 0.0
    %122 = vmatpush1.msra.mxu0 0.0
    %123 = vmatprep.subr.mxu0 0.0
    %124 = vmatpush1.msra.mxu0 0.0
    %125 = vmatprep.subr.mxu0 0.0
    %126 = vmatpush1.msra.mxu0 0.0
    %127 = vmatprep.subr.mxu0 0.0
    %128 = vmatpush1.msra.mxu0 0.0
    %129 = vmatprep.subr.mxu0 0.0
    %130 = vmatpush1.msra.mxu0 %v55
    %131 = vmatprep.subr.mxu0 0.0
    %132 = vmatpush2.msra.mxu0 0.0
    %133 = vmatprep.subr.mxu0 0.0
    %134 = vmatpush2.msra.mxu0 0.0
    %135 = vmatprep.subr.mxu0 0.0
    %136 = vmatpush2.msra.mxu0 0.0
    %137 = vmatprep.subr.mxu0 0.0
    %138 = vmatpush2.msra.mxu0 0.0
    %139 = vmatprep.subr.mxu0 0.0
    %140 = vmatpush2.msra.mxu0 0.0
    %141 = vmatprep.subr.mxu0 0.0
    %142 = vmatpush2.msra.mxu0 0.0
    %143 = vmatprep.subr.mxu0 0.0
    %144 = vmatpush2.msra.mxu0 0.0
    %145 = vmatprep.subr.mxu0 0.0
    %146 = vmatpush2.msra.mxu0 0.0
    %147 = vmatprep.subr.mxu0 0.0
    %148 = vmatpush2.msra.mxu0 0.0
    %149 = vmatprep.subr.mxu0 0.0
    %150 = vmatpush2.msra.mxu0 0.0
    %151 = vmatprep.subr.mxu0 0.0
    %152 = vmatpush2.msra.mxu0 0.0
    %153 = vmatprep.subr.mxu0 0.0
    %154 = vmatpush2.msra.mxu0 0.0
    %155 = vmatprep.subr.mxu0 0.0
    %156 = vmatpush2.msra.mxu0 0.0
    %157 = vmatprep.subr.mxu0 0.0
    %158 = vmatpush2.msra.mxu0 0.0
    %159 = vmatprep.subr.mxu0 0.0
    %160 = vmatpush2.msra.mxu0 0.0
    %161 = vmatprep.subr.mxu0 0.0
    %162 = vmatpush2.msra.mxu0 0.0
    %163 = vmatprep.mubr.f32.mxu0 0.0
    %164 = vmatmul.mubr.f32.gmra.mxu0 %v97
    %v165 = vpop.f32.mrf.mxu0
    %v166 = vadd.f32 %v94, %v165
    %v167 = vpop.f32.mrf.mxu0
    %168 = vdwg.mxu0
    %v169 = vmax.f32 %v166, 0.0
    %v170 = vpack.c.bf16 %v169, %v169
    %v171 = vlaneseq
    %v172 = vshrl.u32 %v171, 7
    %v173 = vsub.s32 0, %v172
    %v174 = vrot.slane %v57, %v173
    %v191 = vunpack.c.l.b16 %v59
    %v192 = vunpack.c.l.b16 %v60
    %v193 = vunpack.c.l.b16 %v61
    %v194 = vunpack.c.l.b16 %v62
    %v195 = vunpack.c.l.b16 %v63
    %v196 = vunpack.c.l.b16 %v64
    %v197 = vunpack.c.l.b16 %v65
    %v198 = vunpack.c.l.b16 %v66
    %v199 = vunpack.c.l.b16 %v67
    %v200 = vunpack.c.l.b16 %v68
    %v201 = vunpack.c.l.b16 %v69
    %v202 = vunpack.c.l.b16 %v70
    %v203 = vunpack.c.l.b16 %v71
    %v204 = vunpack.c.l.b16 %v72
    %v205 = vunpack.c.l.b16 %v73
    %v206 = vunpack.c.l.b16 %v74
    %v207 = vpack.c.b16 %v192, %v191
    %v208 = vpack.c.b16 %v194, %v193
    %v209 = vpack.c.b16 %v196, %v195
    %v210 = vpack.c.b16 %v198, %v197
    %v211 = vpack.c.b16 %v200, %v199
    %v212 = vpack.c.b16 %v202, %v201
    %v213 = vpack.c.b16 %v204, %v203
    %v214 = vpack.c.b16 %v206, %v205
    %223 = vmatprep.subr.bf16.mxu0 0
    %224 = vmatpush1.bf16.msra.mxu0 %v214
    %225 = vmatprep.subr.bf16.mxu0 0
    %226 = vmatpush1.bf16.msra.mxu0 %v213
    %227 = vmatprep.subr.bf16.mxu0 0
    %228 = vmatpush1.bf16.msra.mxu0 %v212
    %229 = vmatprep.subr.bf16.mxu0 0
    %230 = vmatpush1.bf16.msra.mxu0 %v211
    %231 = vmatprep.subr.bf16.mxu0 0
    %232 = vmatpush1.bf16.msra.mxu0 %v210
    %233 = vmatprep.subr.bf16.mxu0 0
    %234 = vmatpush1.bf16.msra.mxu0 %v209
    %235 = vmatprep.subr.bf16.mxu0 0
    %236 = vmatpush1.bf16.msra.mxu0 %v208
    %237 = vmatprep.subr.bf16.mxu0 0
    %238 = vmatpush1.bf16.msra.mxu0 %v207
    %239 = vmatprep.subr.bf16.mxu0 0
    %240 = vmatpush2.bf16.msra.mxu0 0
    %241 = vmatprep.subr.bf16.mxu0 0
    %242 = vmatpush2.bf16.msra.mxu0 0
    %243 = vmatprep.subr.bf16.mxu0 0
    %244 = vmatpush2.bf16.msra.mxu0 0
    %245 = vmatprep.subr.bf16.mxu0 0
    %246 = vmatpush2.bf16.msra.mxu0 0
    %247 = vmatprep.subr.bf16.mxu0 0
    %248 = vmatpush2.bf16.msra.mxu0 0
    %249 = vmatprep.subr.bf16.mxu0 0
    %250 = vmatpush2.bf16.msra.mxu0 0
    %251 = vmatprep.subr.bf16.mxu0 0
    %252 = vmatpush2.bf16.msra.mxu0 0
    %253 = vmatprep.subr.bf16.mxu0 0
    %254 = vmatpush2.bf16.msra.mxu0 0
    %255 = vmatprep.mubr.bf16.mxu0 0
    %256 = vmatmul.mubr.bf16.gmra.mxu0 %v170
    %v257 = vpop.f32.mrf.mxu0
    %v258 = vadd.f32 %v174, %v257
    %v259 = vpop.f32.mrf.mxu0
    %v260 = vpop.f32.mrf.mxu0
    %v261 = vpop.f32.mrf.mxu0
    %262 = vdwg.mxu0
    %v263 = vmax.f32 %v258, 0.0
    %v264 = vpack.c.bf16 %v263, %v263
    %v265 = vlaneseq
    %v266 = vshrl.u32 %v265, 7
    %v267 = vsub.s32 0, %v266
    %v268 = vrot.slane %v58, %v267
    %v285 = vunpack.c.l.b16 %v75
    %v286 = vunpack.c.l.b16 %v76
    %v287 = vunpack.c.l.b16 %v77
    %v288 = vunpack.c.l.b16 %v78
    %v289 = vunpack.c.l.b16 %v79
    %v290 = vunpack.c.l.b16 %v80
    %v291 = vunpack.c.l.b16 %v81
    %v292 = vunpack.c.l.b16 %v82
    %v293 = vunpack.c.l.b16 %v83
    %v294 = vunpack.c.l.b16 %v84
    %v295 = vunpack.c.l.b16 %v85
    %v296 = vunpack.c.l.b16 %v86
    %v297 = vunpack.c.l.b16 %v87
    %v298 = vunpack.c.l.b16 %v88
    %v299 = vunpack.c.l.b16 %v89
    %v300 = vunpack.c.l.b16 %v90
    %v301 = vpack.c.b16 %v286, %v285
    %v302 = vpack.c.b16 %v288, %v287
    %v303 = vpack.c.b16 %v290, %v289
    %v304 = vpack.c.b16 %v292, %v291
    %v305 = vpack.c.b16 %v294, %v293
    %v306 = vpack.c.b16 %v296, %v295
    %v307 = vpack.c.b16 %v298, %v297
    %v308 = vpack.c.b16 %v300, %v299
    %317 = vmatprep.subr.bf16.mxu0 0
    %318 = vmatpush1.bf16.msra.mxu0 %v308
    %319 = vmatprep.subr.bf16.mxu0 0
    %320 = vmatpush1.bf16.msra.mxu0 %v307
    %321 = vmatprep.subr.bf16.mxu0 0
    %322 = vmatpush1.bf16.msra.mxu0 %v306
    %323 = vmatprep.subr.bf16.mxu0 0
    %324 = vmatpush1.bf16.msra.mxu0 %v305
    %325 = vmatprep.subr.bf16.mxu0 0
    %326 = vmatpush1.bf16.msra.mxu0 %v304
    %327 = vmatprep.subr.bf16.mxu0 0
    %328 = vmatpush1.bf16.msra.mxu0 %v303
    %329 = vmatprep.subr.bf16.mxu0 0
    %330 = vmatpush1.bf16.msra.mxu0 %v302
    %331 = vmatprep.subr.bf16.mxu0 0
    %332 = vmatpush1.bf16.msra.mxu0 %v301
    %333 = vmatprep.subr.bf16.mxu0 0
    %334 = vmatpush2.bf16.msra.mxu0 0
    %335 = vmatprep.subr.bf16.mxu0 0
    %336 = vmatpush2.bf16.msra.mxu0 0
    %337 = vmatprep.subr.bf16.mxu0 0
    %338 = vmatpush2.bf16.msra.mxu0 0
    %339 = vmatprep.subr.bf16.mxu0 0
    %340 = vmatpush2.bf16.msra.mxu0 0
    %341 = vmatprep.subr.bf16.mxu0 0
    %342 = vmatpush2.bf16.msra.mxu0 0
    %343 = vmatprep.subr.bf16.mxu0 0
    %344 = vmatpush2.bf16.msra.mxu0 0
    %345 = vmatprep.subr.bf16.mxu0 0
    %346 = vmatpush2.bf16.msra.mxu0 0
    %347 = vmatprep.subr.bf16.mxu0 0
    %348 = vmatpush2.bf16.msra.mxu0 0
    %349 = vmatprep.mubr.bf16.mxu0 0
    %350 = vmatmul.mubr.bf16.gmra.mxu0 %v264
    %v351 = vpop.f32.mrf.mxu0
    %v352 = vadd.f32 %v268, %v351
    %v353 = vpop.f32.mrf.mxu0
    %v354 = vpop.f32.mrf.mxu0
    %v355 = vpop.f32.mrf.mxu0
    %356 = vdwg.mxu0
    %vm357 = vcmask 31744
    %358 = vst.msk [vmem:[%s3] sm:$0xff] %vm357, %v352
    // Predicated region
    $region26: #{tpu_custom_call.1} parent=1 // pred_check
      _
    $region27: #{tpu_custom_call.1} parent=1 // pred_check_branch
      %360 = sbr.rel (0) target = $region29
    $region28: #{tpu_custom_call.1} parent=1 // pred_region
      _
    $region29: #{tpu_custom_call.1} parent=1 // pred_fallthru
      _
    // Predicated region
    $region30: #{tpu_custom_call.1} parent=1 // pred_check
      _
    $region31: #{tpu_custom_call.1} parent=1 // pred_check_branch
      %362 = sbr.rel (0) target = $region33
    $region32: #{tpu_custom_call.1} parent=1 // pred_region
      _
    $region33: #{tpu_custom_call.1} parent=1 // pred_fallthru
      _
    %363 = vsyncpa [#allocation3], 1
    %364 = vsyncpa [#allocation5], 1

</llo_original>
